<compile_context>
chip_gen: v5e
topology: v5e:2x2
jax: 0.10.0
libtpu: 0.0.40
codegen_flags: <defaults>
</compile_context>

<pallas_src>
import functools

import jax
import jax.numpy as jnp
import numpy as np
from jax.experimental import pallas as pl
from jax.experimental.pallas import tpu as pltpu


def _aff_kernel(
    F, T,
    w0_ref,                       # SMEM (1,)    : mlp weight on the local branch
    x_ref, a_ref,                 # VMEM [S,F*T], [S,S]
    w1_ref, b1_ref,               # [F*T, INTER], [1, INTER]
    w2_ref, b2_ref,               # [INTER, F*T], [1, F*T]
    c1_ref, c1b_ref,              # [F*T, INTER*T], [1, INTER*T]   (BN1-folded kron conv1)
    c2_ref, c2b_ref,              # [INTER*T, F*T], [1, F*T]       (BN2 + mlp_w1/bias folded)
    g_ref, gt_ref,                # [F*T, T] group indicator, [T, F*T] its transpose
    out_ref,                      # [S, T]
):
    x = x_ref[...]                # [S, F*T]
    a = a_ref[...]                # [S, S]

    # ---- local branch: GCN1 + ReLU, GCN2 + ReLU  ->  xl [S, F*T] ----
    h1 = jnp.maximum(
        jnp.dot(a, jnp.dot(x, w1_ref[...], preferred_element_type=jnp.float32),
                preferred_element_type=jnp.float32) + b1_ref[...], 0.0)
    xl = jnp.maximum(
        jnp.dot(a, jnp.dot(h1, w2_ref[...], preferred_element_type=jnp.float32),
                preferred_element_type=jnp.float32) + b2_ref[...], 0.0)

    # ---- global branch, entirely in flat [*, F*T] lane layout ----
    # AdaptiveAvgPool2d(1): one sublane reduction over sites (no per-f slicing/concat).
    pooled = jnp.mean(x, axis=0, keepdims=True)                                 # [1, F*T]
    # 1x1 conv + BN + ReLU  (conv realized as kron(W, I_T) matmul, BN folded in glue)
    g1 = jnp.maximum(
        jnp.dot(pooled, c1_ref[...], preferred_element_type=jnp.float32)
        + c1b_ref[...], 0.0)                                                    # [1, INTER*T]
    # 1x1 conv + BN, with the mlp's w1 and bias already folded in -> xg = w1*global_att(x)+b
    xg = jnp.dot(g1, c2_ref[...], preferred_element_type=jnp.float32) + c2b_ref[...]  # [1, F*T]

    # ---- fused mlp(2->1) + ReLU over the full slab ----
    z = jnp.maximum(w0_ref[0] * xl + xg, 0.0)                                   # [S, F*T]

    # ---- per-(site, timestamp) max over the F feature groups ----
    # Column index is f*T + t, so halving the slab reduces over f (high bits) exactly.
    if F & (F - 1) == 0:
        m = z
        width = F * T
        while width > T:
            width //= 2
            m = jnp.maximum(m[:, :width], m[:, width:2 * width])                # -> [S, T]
    else:
        m = z[:, :T]
        for f in range(1, F):
            m = jnp.maximum(m, z[:, f * T:(f + 1) * T])

    # ---- softmax over features + feature-weighted sum of x ----
    # Broadcast the max back to the slab and do both group sums as indicator matmuls
    # on the otherwise-idle MXU. One exp over the whole slab.
    e = jnp.exp(z - jnp.dot(m, gt_ref[...], preferred_element_type=jnp.float32))   # [S, F*T]
    denom = jnp.dot(e, g_ref[...], preferred_element_type=jnp.float32)             # [S, T]
    num = jnp.dot(x * e, g_ref[...], preferred_element_type=jnp.float32)           # [S, T]
    # denom >= 1 (the exp(0) term at the max), so the approx EUP reciprocal is safe.
    out_ref[...] = num * pl.reciprocal(denom, approx=True)


def modified_aff_forward(x, edge_index, params, *, T, F, r=4):
    """x: [T, F, S, 1] float32, edge_index: [2, E] int32. Returns [T, S, 1] (== PyTorch output)."""
    S = x.shape[2]
    INTER = (F // r) * T

    # ---- glue: layout plumbing + parameter folding (plain JAX, constants only) ----
    x_gcn = jnp.transpose(x[..., 0], (2, 1, 0)).reshape(S, F * T)               # [S, F*T]

    # dense GCN-normalized adjacency with self loops (A[dst, src] = 1)
    A = jnp.zeros((S, S), jnp.float32)
    A = A.at[edge_index[1], edge_index[0]].set(1.0)
    A = jnp.maximum(A, jnp.eye(S, dtype=jnp.float32))
    dinv = jax.lax.rsqrt(jnp.sum(A, axis=1))
    a_hat = dinv[:, None] * A * dinv[None, :]

    # fold eval-mode BatchNorm into the 1x1 conv weights/biases
    eps = 1e-5
    bn1s = params["bn1_gamma"] / jnp.sqrt(params["bn1_var"] + eps)
    bn1h = params["bn1_beta"] - params["bn1_mean"] * bn1s
    bn2s = params["bn2_gamma"] / jnp.sqrt(params["bn2_var"] + eps)
    bn2h = params["bn2_beta"] - params["bn2_mean"] * bn2s

    c1w_eff = bn1s[:, None] * params["c1w"]                                     # [INTER, F]
    c1b_eff = bn1s * params["c1b"] + bn1h                                       # [INTER]
    c2w_eff = bn2s[:, None] * params["c2w"]                                     # [F, INTER]
    c2b_eff = bn2s * params["c2b"] + bn2h                                       # [F]

    # fold the mlp's global-branch weight and bias into conv2 (w0 stays separate: it
    # cannot be folded through GCN2's ReLU because its sign is unknown).
    w0 = params["mlp_w"][0, 0]
    w1 = params["mlp_w"][0, 1]
    mb = params["mlp_b"][0]
    c2w_eff = w1 * c2w_eff
    c2b_eff = w1 * c2b_eff + mb

    # flat-lane-layout (column index = channel*T + t) versions of the 1x1 convs
    eyeT = jnp.eye(T, dtype=jnp.float32)
    C1f = jnp.kron(c1w_eff.T, eyeT)                                             # [F*T, INTER*T]
    b1f = jnp.repeat(c1b_eff, T).reshape(1, INTER * T)
    C2f = jnp.kron(c2w_eff.T, eyeT)                                             # [INTER*T, F*T]
    b2f = jnp.repeat(c2b_eff, T).reshape(1, F * T)

    # constant feature-group indicator for the softmax reductions on the MXU
    G = jnp.tile(eyeT, (F, 1))                                                  # [F*T, T]
    GT = jnp.transpose(G)                                                       # [T, F*T]

    w0_smem = jnp.asarray([w0], jnp.float32)

    kernel = functools.partial(_aff_kernel, F, T)
    out_st = pl.pallas_call(
        kernel,
        out_shape=jax.ShapeDtypeStruct((S, T), jnp.float32),
        in_specs=[pl.BlockSpec(memory_space=pltpu.MemorySpace.SMEM)]
                 + [pl.BlockSpec(memory_space=pltpu.MemorySpace.VMEM)] * 12,
        out_specs=pl.BlockSpec(memory_space=pltpu.MemorySpace.VMEM),
    )(
        w0_smem, x_gcn, a_hat,
        params["W1"], params["b1"].reshape(1, INTER),
        params["W2"], params["b2"].reshape(1, F * T),
        C1f, b1f, C2f, b2f, G, GT,
    )

    return jnp.transpose(out_st)[:, :, None]                                    # [T, S, 1]


def reference_forward(x, edge_index, params, *, T, F, r=4):
    """Pure-JAX mirror of the PyTorch forward (eval-mode BN), for validation."""
    S = x.shape[2]
    A = jnp.zeros((S, S), jnp.float32)
    A = A.at[edge_index[1], edge_index[0]].set(1.0)
    A = jnp.maximum(A, jnp.eye(S, dtype=jnp.float32))
    dinv = jax.lax.rsqrt(jnp.sum(A, axis=1))
    a_hat = dinv[:, None] * A * dinv[None, :]

    x_gcn = jnp.transpose(x[..., 0], (2, 1, 0)).reshape(S, F * T)
    h1 = jax.nn.relu(a_hat @ (x_gcn @ params["W1"]) + params["b1"])
    xl_flat = jax.nn.relu(a_hat @ (h1 @ params["W2"]) + params["b2"])
    xl = jnp.transpose(xl_flat.reshape(S, F, T), (2, 1, 0))                     # [T, F, S]

    eps = 1e-5
    pooled = jnp.mean(x, axis=(2, 3))                                           # [T, F]
    g1 = pooled @ params["c1w"].T + params["c1b"]
    g1 = (g1 - params["bn1_mean"]) / jnp.sqrt(params["bn1_var"] + eps)
    g1 = jax.nn.relu(g1 * params["bn1_gamma"] + params["bn1_beta"])
    xg = g1 @ params["c2w"].T + params["c2b"]
    xg = (xg - params["bn2_mean"]) / jnp.sqrt(params["bn2_var"] + eps)
    xg = xg * params["bn2_gamma"] + params["bn2_beta"]                          # [T, F]

    w0, w1 = params["mlp_w"][0, 0], params["mlp_w"][0, 1]
    z = jax.nn.relu(w0 * xl + w1 * xg[:, :, None] + params["mlp_b"][0])         # [T, F, S]
    w = jax.nn.softmax(z, axis=1)
    out = jnp.sum(x[..., 0] * w, axis=1)                                        # [T, S]
    return out[:, :, None]


def init_params(key, *, T, F, r=4):
    INTER = (F // r) * T
    ks = jax.random.split(key, 8)
    p = {
        "W1": 0.1 * jax.random.normal(ks[0], (F * T, INTER), jnp.float32),
        "b1": 0.05 * jax.random.normal(ks[1], (INTER,), jnp.float32),
        "W2": 0.1 * jax.random.normal(ks[2], (INTER, F * T), jnp.float32),
        "b2": 0.05 * jax.random.normal(ks[3], (F * T,), jnp.float32),
        "c1w": 0.2 * jax.random.normal(ks[4], (INTER, F), jnp.float32),
        "c1b": jnp.zeros((INTER,), jnp.float32),
        "c2w": 0.2 * jax.random.normal(ks[5], (F, INTER), jnp.float32),
        "c2b": jnp.zeros((F,), jnp.float32),
        "bn1_gamma": jnp.ones((INTER,), jnp.float32),
        "bn1_beta": jnp.zeros((INTER,), jnp.float32),
        "bn1_mean": jnp.zeros((INTER,), jnp.float32),
        "bn1_var": jnp.ones((INTER,), jnp.float32),
        "bn2_gamma": jnp.ones((F,), jnp.float32),
        "bn2_beta": jnp.zeros((F,), jnp.float32),
        "bn2_mean": jnp.zeros((F,), jnp.float32),
        "bn2_var": jnp.ones((F,), jnp.float32),
        "mlp_w": 0.5 * jax.random.normal(ks[6], (1, 2), jnp.float32),
        "mlp_b": 0.1 * jax.random.normal(ks[7], (1,), jnp.float32),
    }
    return p


if __name__ == "__main__":
    # small, module-consistent shapes: num_timestamps=8, num_features=8, num_sites=16
    T, F, r, S = 8, 8, 4, 16

    key = jax.random.PRNGKey(0)
    kx, kp = jax.random.split(key)
    x = jax.random.normal(kx, (T, F, S, 1), jnp.float32)      # NCHW: [T, F, S, 1]

    # symmetric ring graph as edge_index [2, E]
    idx = np.arange(S)
    src = np.concatenate([idx, idx])
    dst = np.concatenate([(idx + 1) % S, (idx - 1) % S])
    edge_index = jnp.asarray(np.stack([src, dst]), dtype=jnp.int32)

    params = init_params(kp, T=T, F=F, r=r)

    out = modified_aff_forward(x, edge_index, params, T=T, F=F, r=r)
    out = jax.block_until_ready(out)

    ref = reference_forward(x, edge_index, params, T=T, F=F, r=r)
    assert out.shape == (T, S, 1), out.shape
    np.testing.assert_allclose(np.asarray(out), np.asarray(ref), rtol=2e-2, atol=2e-2)

    print("KERNEL_OK")
</pallas_src>

<mosaic_0001>
module attributes {stable_mosaic.version = 11 : i64} {
  func.func @_aff_kernel(%arg0: memref<1xf32, #tpu.memory_space<smem>>, %arg1: memref<16x64xf32, #tpu.memory_space<vmem>>, %arg2: memref<16x16xf32, #tpu.memory_space<vmem>>, %arg3: memref<64x16xf32, #tpu.memory_space<vmem>>, %arg4: memref<1x16xf32, #tpu.memory_space<vmem>>, %arg5: memref<16x64xf32, #tpu.memory_space<vmem>>, %arg6: memref<1x64xf32, #tpu.memory_space<vmem>>, %arg7: memref<64x128xf32, #tpu.memory_space<vmem>>, %arg8: memref<1x128xf32, #tpu.memory_space<vmem>>, %arg9: memref<128x64xf32, #tpu.memory_space<vmem>>, %arg10: memref<1x64xf32, #tpu.memory_space<vmem>>, %arg11: memref<64x8xf32, #tpu.memory_space<vmem>>, %arg12: memref<8x64xf32, #tpu.memory_space<vmem>>, %arg13: memref<16x8xf32, #tpu.memory_space<vmem>>) attributes {dimension_semantics = [], scalar_prefetch = 0 : i64, scratch_operands = 0 : i64, tpu.core_type = #tpu.core_type<tc>} {
    %c0 = arith.constant 0 : index
    %c0_0 = arith.constant 0 : index
    %0 = vector.load %arg1[%c0, %c0_0] : memref<16x64xf32, #tpu.memory_space<vmem>>, vector<16x64xf32>
    %c0_1 = arith.constant 0 : index
    %c0_2 = arith.constant 0 : index
    %1 = vector.load %arg2[%c0_1, %c0_2] : memref<16x16xf32, #tpu.memory_space<vmem>>, vector<16x16xf32>
    %c0_3 = arith.constant 0 : index
    %c0_4 = arith.constant 0 : index
    %2 = vector.load %arg3[%c0_3, %c0_4] : memref<64x16xf32, #tpu.memory_space<vmem>>, vector<64x16xf32>
    %cst = arith.constant dense<0.000000e+00> : vector<16x16xf32>
    %3 = tpu.matmul %0, %2, %cst {dimension_numbers = #tpu.dot_dimension_numbers<[1], [0], [0], [1], [0, 0, 1, 1], [], []>} : vector<16x64xf32>, vector<64x16xf32>, vector<16x16xf32> -> vector<16x16xf32>
    %cst_5 = arith.constant dense<0.000000e+00> : vector<16x16xf32>
    %4 = tpu.matmul %1, %3, %cst_5 {dimension_numbers = #tpu.dot_dimension_numbers<[1], [0], [0], [1], [0, 0, 1, 1], [], []>} : vector<16x16xf32>, vector<16x16xf32>, vector<16x16xf32> -> vector<16x16xf32>
    %c0_6 = arith.constant 0 : index
    %c0_7 = arith.constant 0 : index
    %5 = vector.load %arg4[%c0_6, %c0_7] : memref<1x16xf32, #tpu.memory_space<vmem>>, vector<1x16xf32>
    %6 = vector.broadcast %5 : vector<1x16xf32> to vector<16x16xf32>
    %7 = arith.addf %4, %6 : vector<16x16xf32>
    %cst_8 = arith.constant 0.000000e+00 : f32
    %8 = vector.broadcast %cst_8 : f32 to vector<16x16xf32>
    %9 = arith.maximumf %7, %8 : vector<16x16xf32>
    %c0_9 = arith.constant 0 : index
    %c0_10 = arith.constant 0 : index
    %10 = vector.load %arg5[%c0_9, %c0_10] : memref<16x64xf32, #tpu.memory_space<vmem>>, vector<16x64xf32>
    %cst_11 = arith.constant dense<0.000000e+00> : vector<16x64xf32>
    %11 = tpu.matmul %9, %10, %cst_11 {dimension_numbers = #tpu.dot_dimension_numbers<[1], [0], [0], [1], [0, 0, 1, 1], [], []>} : vector<16x16xf32>, vector<16x64xf32>, vector<16x64xf32> -> vector<16x64xf32>
    %cst_12 = arith.constant dense<0.000000e+00> : vector<16x64xf32>
    %12 = tpu.matmul %1, %11, %cst_12 {dimension_numbers = #tpu.dot_dimension_numbers<[1], [0], [0], [1], [0, 0, 1, 1], [], []>} : vector<16x16xf32>, vector<16x64xf32>, vector<16x64xf32> -> vector<16x64xf32>
    %c0_13 = arith.constant 0 : index
    %c0_14 = arith.constant 0 : index
    %13 = vector.load %arg6[%c0_13, %c0_14] : memref<1x64xf32, #tpu.memory_space<vmem>>, vector<1x64xf32>
    %14 = vector.broadcast %13 : vector<1x64xf32> to vector<16x64xf32>
    %15 = arith.addf %12, %14 : vector<16x64xf32>
    %cst_15 = arith.constant 0.000000e+00 : f32
    %16 = vector.broadcast %cst_15 : f32 to vector<16x64xf32>
    %17 = arith.maximumf %15, %16 : vector<16x64xf32>
    %cst_16 = arith.constant dense<0.000000e+00> : vector<64xf32>
    %18 = vector.multi_reduction <add>, %0, %cst_16 [0] : vector<16x64xf32> to vector<64xf32>
    %19 = vector.shape_cast %18 : vector<64xf32> to vector<1x64xf32>
    %cst_17 = arith.constant 1.600000e+01 : f32
    %20 = vector.broadcast %cst_17 : f32 to vector<1x64xf32>
    %21 = arith.divf %19, %20 : vector<1x64xf32>
    %c0_18 = arith.constant 0 : index
    %c0_19 = arith.constant 0 : index
    %22 = vector.load %arg7[%c0_18, %c0_19] : memref<64x128xf32, #tpu.memory_space<vmem>>, vector<64x128xf32>
    %cst_20 = arith.constant dense<0.000000e+00> : vector<1x128xf32>
    %23 = tpu.matmul %21, %22, %cst_20 {dimension_numbers = #tpu.dot_dimension_numbers<[1], [0], [0], [1], [0, 0, 1, 1], [], []>} : vector<1x64xf32>, vector<64x128xf32>, vector<1x128xf32> -> vector<1x128xf32>
    %c0_21 = arith.constant 0 : index
    %c0_22 = arith.constant 0 : index
    %24 = vector.load %arg8[%c0_21, %c0_22] : memref<1x128xf32, #tpu.memory_space<vmem>>, vector<1x128xf32>
    %25 = arith.addf %23, %24 : vector<1x128xf32>
    %cst_23 = arith.constant 0.000000e+00 : f32
    %26 = vector.broadcast %cst_23 : f32 to vector<1x128xf32>
    %27 = arith.maximumf %25, %26 : vector<1x128xf32>
    %c0_24 = arith.constant 0 : index
    %c0_25 = arith.constant 0 : index
    %28 = vector.load %arg9[%c0_24, %c0_25] : memref<128x64xf32, #tpu.memory_space<vmem>>, vector<128x64xf32>
    %cst_26 = arith.constant dense<0.000000e+00> : vector<1x64xf32>
    %29 = tpu.matmul %27, %28, %cst_26 {dimension_numbers = #tpu.dot_dimension_numbers<[1], [0], [0], [1], [0, 0, 1, 1], [], []>} : vector<1x128xf32>, vector<128x64xf32>, vector<1x64xf32> -> vector<1x64xf32>
    %c0_27 = arith.constant 0 : index
    %c0_28 = arith.constant 0 : index
    %30 = vector.load %arg10[%c0_27, %c0_28] : memref<1x64xf32, #tpu.memory_space<vmem>>, vector<1x64xf32>
    %31 = arith.addf %29, %30 : vector<1x64xf32>
    %c0_29 = arith.constant 0 : index
    %32 = memref.load %arg0[%c0_29] : memref<1xf32, #tpu.memory_space<smem>>
    %33 = vector.broadcast %32 : f32 to vector<16x64xf32>
    %34 = arith.mulf %33, %17 : vector<16x64xf32>
    %35 = vector.broadcast %31 : vector<1x64xf32> to vector<16x64xf32>
    %36 = arith.addf %34, %35 : vector<16x64xf32>
    %cst_30 = arith.constant 0.000000e+00 : f32
    %37 = vector.broadcast %cst_30 : f32 to vector<16x64xf32>
    %38 = arith.maximumf %36, %37 : vector<16x64xf32>
    %39 = vector.extract_strided_slice %38 {offsets = [0, 0], sizes = [16, 32], strides = [1, 1]} : vector<16x64xf32> to vector<16x32xf32>
    %40 = vector.extract_strided_slice %38 {offsets = [0, 32], sizes = [16, 32], strides = [1, 1]} : vector<16x64xf32> to vector<16x32xf32>
    %41 = arith.maximumf %39, %40 : vector<16x32xf32>
    %42 = vector.extract_strided_slice %41 {offsets = [0, 0], sizes = [16, 16], strides = [1, 1]} : vector<16x32xf32> to vector<16x16xf32>
    %43 = vector.extract_strided_slice %41 {offsets = [0, 16], sizes = [16, 16], strides = [1, 1]} : vector<16x32xf32> to vector<16x16xf32>
    %44 = arith.maximumf %42, %43 : vector<16x16xf32>
    %45 = vector.extract_strided_slice %44 {offsets = [0, 0], sizes = [16, 8], strides = [1, 1]} : vector<16x16xf32> to vector<16x8xf32>
    %46 = vector.extract_strided_slice %44 {offsets = [0, 8], sizes = [16, 8], strides = [1, 1]} : vector<16x16xf32> to vector<16x8xf32>
    %47 = arith.maximumf %45, %46 : vector<16x8xf32>
    %c0_31 = arith.constant 0 : index
    %c0_32 = arith.constant 0 : index
    %48 = vector.load %arg12[%c0_31, %c0_32] : memref<8x64xf32, #tpu.memory_space<vmem>>, vector<8x64xf32>
    %cst_33 = arith.constant dense<0.000000e+00> : vector<16x64xf32>
    %49 = tpu.matmul %47, %48, %cst_33 {dimension_numbers = #tpu.dot_dimension_numbers<[1], [0], [0], [1], [0, 0, 1, 1], [], []>} : vector<16x8xf32>, vector<8x64xf32>, vector<16x64xf32> -> vector<16x64xf32>
    %50 = arith.subf %38, %49 : vector<16x64xf32>
    %51 = math.exp %50 : vector<16x64xf32>
    %c0_34 = arith.constant 0 : index
    %c0_35 = arith.constant 0 : index
    %52 = vector.load %arg11[%c0_34, %c0_35] : memref<64x8xf32, #tpu.memory_space<vmem>>, vector<64x8xf32>
    %cst_36 = arith.constant dense<0.000000e+00> : vector<16x8xf32>
    %53 = tpu.matmul %51, %52, %cst_36 {dimension_numbers = #tpu.dot_dimension_numbers<[1], [0], [0], [1], [0, 0, 1, 1], [], []>} : vector<16x64xf32>, vector<64x8xf32>, vector<16x8xf32> -> vector<16x8xf32>
    %54 = arith.mulf %0, %51 : vector<16x64xf32>
    %c0_37 = arith.constant 0 : index
    %c0_38 = arith.constant 0 : index
    %55 = vector.load %arg11[%c0_37, %c0_38] : memref<64x8xf32, #tpu.memory_space<vmem>>, vector<64x8xf32>
    %cst_39 = arith.constant dense<0.000000e+00> : vector<16x8xf32>
    %56 = tpu.matmul %54, %55, %cst_39 {dimension_numbers = #tpu.dot_dimension_numbers<[1], [0], [0], [1], [0, 0, 1, 1], [], []>} : vector<16x64xf32>, vector<64x8xf32>, vector<16x8xf32> -> vector<16x8xf32>
    %57 = tpu.reciprocal %53 {approx = true} : vector<16x8xf32> -> vector<16x8xf32>
    %58 = arith.mulf %56, %57 : vector<16x8xf32>
    %c0_40 = arith.constant 0 : index
    %c0_41 = arith.constant 0 : index
    %59 = vector.load %arg13[%c0_40, %c0_41] : memref<16x8xf32, #tpu.memory_space<vmem>>, vector<16x8xf32>
    tpu.vector_store %arg13[%c0_40, %c0_41], %58 {strides = array<i32>} : memref<16x8xf32, #tpu.memory_space<vmem>>, vector<16x8xf32>,
    return
  }
}

</mosaic_0001>

<llo_original>
// kernel: tpu_custom_call.1
$region0: #{tpu_custom_call.1}
  #allocation0 [shape = 'u32[]', space=smem, size = 0x4, offset = 0x4, fixed_abs, tag = 'smem constant byte address 0x4 - core index']
  #allocation1 [shape = 'u32[72,128]{1,0:T(1,128)}', space=vmem, size = 0x9000, scoped, tag = 'internal scratch']
  #allocation2 [shape = 'f32[1]{0:T(128)S(6)}', space=smem, size = 0x200, scoped, tag = 'scoped memory for tpu_custom_call.1']
  %s0 = inlined_call_operand.<no memory space> [shape: f32[1], index: 0, kind: input, shape index: {}]
  %s1 = inlined_call_operand.vmem [shape: f32[16,64], index: 1, kind: input, shape index: {}]
  %s2 = inlined_call_operand.vmem [shape: f32[16,16], index: 2, kind: input, shape index: {}]
  %s3 = inlined_call_operand.vmem [shape: f32[64,16], index: 3, kind: input, shape index: {}]
  %s4 = inlined_call_operand.vmem [shape: f32[1,16], index: 4, kind: input, shape index: {}]
  %s5 = inlined_call_operand.vmem [shape: f32[16,64], index: 5, kind: input, shape index: {}]
  %s6 = inlined_call_operand.vmem [shape: f32[1,64], index: 6, kind: input, shape index: {}]
  %s7 = inlined_call_operand.vmem [shape: f32[64,128], index: 7, kind: input, shape index: {}]
  %s8 = inlined_call_operand.vmem [shape: f32[1,128], index: 8, kind: input, shape index: {}]
  %s9 = inlined_call_operand.vmem [shape: f32[128,64], index: 9, kind: input, shape index: {}]
  %s10 = inlined_call_operand.vmem [shape: f32[1,64], index: 10, kind: input, shape index: {}]
  %s11 = inlined_call_operand.vmem [shape: f32[64,8], index: 11, kind: input, shape index: {}]
  %s12 = inlined_call_operand.vmem [shape: f32[8,64], index: 12, kind: input, shape index: {}]
  %s13 = inlined_call_operand.vmem [shape: f32[16,8], index: 13, kind: output, shape index: {}]
  %s14 = sld [smem:[#allocation0]]
  $region62: #{tpu_custom_call.1} parent=0
    _
  %s16 = ssub.s32 1, %s14
  %s17 = scalar_select 0, %s16, %s14
  %18 = sst [smem:[#allocation2]] %s0
  // Predicated region
  $region2: #{tpu_custom_call.1} parent=0 // pred_check
    _
  $region3: #{tpu_custom_call.1} parent=0 // pred_check_branch
    %20 = sbr.rel (0) target = $region5
  $region4: #{tpu_custom_call.1} parent=0 // pred_region
    _
  $region5: #{tpu_custom_call.1} parent=0 // pred_fallthru
    _
  // Predicated region
  $region6: #{tpu_custom_call.1} parent=0 // pred_check
    _
  $region7: #{tpu_custom_call.1} parent=0 // pred_check_branch
    %22 = sbr.rel (0) target = $region9
  $region8: #{tpu_custom_call.1} parent=0 // pred_region
    _
  $region9: #{tpu_custom_call.1} parent=0 // pred_fallthru
    _
  // Predicated region
  $region10: #{tpu_custom_call.1} parent=0 // pred_check
    _
  $region11: #{tpu_custom_call.1} parent=0 // pred_check_branch
    %24 = sbr.rel (0) target = $region13
  $region12: #{tpu_custom_call.1} parent=0 // pred_region
    _
  $region13: #{tpu_custom_call.1} parent=0 // pred_fallthru
    _
  // Predicated region
  $region14: #{tpu_custom_call.1} parent=0 // pred_check
    _
  $region15: #{tpu_custom_call.1} parent=0 // pred_check_branch
    %26 = sbr.rel (0) target = $region17
  $region16: #{tpu_custom_call.1} parent=0 // pred_region
    _
  $region17: #{tpu_custom_call.1} parent=0 // pred_fallthru
    _
  // Predicated region
  $region18: #{tpu_custom_call.1} parent=0 // pred_check
    _
  $region19: #{tpu_custom_call.1} parent=0 // pred_check_branch
    %28 = sbr.rel (0) target = $region21
  $region20: #{tpu_custom_call.1} parent=0 // pred_region
    _
  $region21: #{tpu_custom_call.1} parent=0 // pred_fallthru
    _
  // Predicated region
  $region22: #{tpu_custom_call.1} parent=0 // pred_check
    _
  $region23: #{tpu_custom_call.1} parent=0 // pred_check_branch
    %30 = sbr.rel (0) target = $region25
  $region24: #{tpu_custom_call.1} parent=0 // pred_region
    _
  $region25: #{tpu_custom_call.1} parent=0 // pred_fallthru
    _
  // Predicated region
  $region26: #{tpu_custom_call.1} parent=0 // pred_check
    _
  $region27: #{tpu_custom_call.1} parent=0 // pred_check_branch
    %32 = sbr.rel (0) target = $region29
  $region28: #{tpu_custom_call.1} parent=0 // pred_region
    _
  $region29: #{tpu_custom_call.1} parent=0 // pred_fallthru
    _
  // Predicated region
  $region30: #{tpu_custom_call.1} parent=0 // pred_check
    _
  $region31: #{tpu_custom_call.1} parent=0 // pred_check_branch
    %34 = sbr.rel (0) target = $region33
  $region32: #{tpu_custom_call.1} parent=0 // pred_region
    _
  $region33: #{tpu_custom_call.1} parent=0 // pred_fallthru
    _
  // Predicated region
  $region34: #{tpu_custom_call.1} parent=0 // pred_check
    _
  $region35: #{tpu_custom_call.1} parent=0 // pred_check_branch
    %36 = sbr.rel (0) target = $region37
  $region36: #{tpu_custom_call.1} parent=0 // pred_region
    _
  $region37: #{tpu_custom_call.1} parent=0 // pred_fallthru
    _
  // Predicated region
  $region38: #{tpu_custom_call.1} parent=0 // pred_check
    _
  $region39: #{tpu_custom_call.1} parent=0 // pred_check_branch
    %38 = sbr.rel (0) target = $region41
  $region40: #{tpu_custom_call.1} parent=0 // pred_region
    _
  $region41: #{tpu_custom_call.1} parent=0 // pred_fallthru
    _
  // Predicated region
  $region42: #{tpu_custom_call.1} parent=0 // pred_check
    _
  $region43: #{tpu_custom_call.1} parent=0 // pred_check_branch
    %40 = sbr.rel (0) target = $region45
  $region44: #{tpu_custom_call.1} parent=0 // pred_region
    _
  $region45: #{tpu_custom_call.1} parent=0 // pred_fallthru
    _
  // Predicated region
  $region46: #{tpu_custom_call.1} parent=0 // pred_check
    _
  $region47: #{tpu_custom_call.1} parent=0 // pred_check_branch
    %42 = sbr.rel (0) target = $region49
  $region48: #{tpu_custom_call.1} parent=0 // pred_region
    _
  $region49: #{tpu_custom_call.1} parent=0 // pred_fallthru
    _
  // Predicated region
  $region50: #{tpu_custom_call.1} parent=0 // pred_check
    _
  $region51: #{tpu_custom_call.1} parent=0 // pred_check_branch
    %44 = sbr.rel (0) target = $region53
  $region52: #{tpu_custom_call.1} parent=0 // pred_region
    _
  $region53: #{tpu_custom_call.1} parent=0 // pred_fallthru
    _
  %v45 = vld [vmem:[%s1] sm:$0xff]
  %v46 = vld [vmem:[%s1 + $0x8] sm:$0xff]
  %v47 = vld [vmem:[%s2] sm:$0xff]
  %v48 = vld [vmem:[%s2 + $0x8] sm:$0xff]
  %v49 = vld [vmem:[%s3] sm:$0xff]
  %v50 = vld [vmem:[%s3 + $0x8] sm:$0xff]
  %v51 = vld [vmem:[%s3 + $0x10] sm:$0xff]
  %v52 = vld [vmem:[%s3 + $0x18] sm:$0xff]
  %v53 = vld [vmem:[%s3 + $0x20] sm:$0xff]
  %v54 = vld [vmem:[%s3 + $0x28] sm:$0xff]
  %v55 = vld [vmem:[%s3 + $0x30] sm:$0xff]
  %v56 = vld [vmem:[%s3 + $0x38] sm:$0xff]
  %vm57 = vcmask 523264
  %v59 = vsel %vm57, %v45, 0
  %v62 = vsel %vm57, %v46, 0
  %64 = vmatpush.msra.mxu0 0.0
  %65 = vmatpush.msra.mxu0 0.0
  %66 = vmatpush.msra.mxu0 0.0
  %67 = vmatpush.msra.mxu0 0.0
  %68 = vmatpush.msra.mxu0 0.0
  %69 = vmatpush.msra.mxu0 0.0
  %70 = vmatpush.msra.mxu0 0.0
  %71 = vmatpush.msra.mxu0 0.0
  %72 = vmatpush.msra.mxu0 %v56
  %73 = vmatpush.msra.mxu0 %v55
  %74 = vmatpush.msra.mxu0 %v54
  %75 = vmatpush.msra.mxu0 %v53
  %76 = vmatpush.msra.mxu0 %v52
  %77 = vmatpush.msra.mxu0 %v51
  %78 = vmatpush.msra.mxu0 %v50
  %79 = vmatpush.msra.mxu0 %v49
  %80 = vmatmul.f32.gmra.mxu0 %v59
  %v81 = vpop.f32.mrf.mxu0
  %v82 = vadd.f32 0.0, %v81
  %83 = vmatmul.f32.gmra.mxu0 %v62
  %v84 = vpop.f32.mrf.mxu0
  %v85 = vadd.f32 0.0, %v84
  %86 = vdwg.mxu0
  %v87 = vld [vmem:[%s4] sm:$0x1]
  %v89 = vperm.slane %v87, 0
  %vm91 = vcmask 130048
  %v93 = vsel %vm91, %v47, 0
  %v96 = vsel %vm91, %v48, 0
  %98 = vmatpush.msra.mxu0 0.0
  %99 = vmatpush.msra.mxu0 0.0
  %100 = vmatpush.msra.mxu0 0.0
  %101 = vmatpush.msra.mxu0 0.0
  %102 = vmatpush.msra.mxu0 0.0
  %103 = vmatpush.msra.mxu0 0.0
  %104 = vmatpush.msra.mxu0 0.0
  %105 = vmatpush.msra.mxu0 0.0
  %106 = vmatpush.msra.mxu0 0.0
  %107 = vmatpush.msra.mxu0 0.0
  %108 = vmatpush.msra.mxu0 0.0
  %109 = vmatpush.msra.mxu0 0.0
  %110 = vmatpush.msra.mxu0 0.0
  %111 = vmatpush.msra.mxu0 0.0
  %112 = vmatpush.msra.mxu0 %v85
  %113 = vmatpush.msra.mxu0 %v82
  %114 = vmatmul.f32.gmra.mxu0 %v93
  %v115 = vpop.f32.mrf.mxu0
  %v116 = vadd.f32 %v89, %v115
  %117 = vmatmul.f32.gmra.mxu0 %v96
  %v118 = vpop.f32.mrf.mxu0
  %v119 = vadd.f32 %v89, %v118
  %120 = vdwg.mxu0
  %v121 = vmax.f32 %v116, 0.0
  %v122 = vmax.f32 %v119, 0.0
  %v123 = vld [vmem:[%s5] sm:$0xff]
  %v124 = vld [vmem:[%s5 + $0x8] sm:$0xff]
  %v126 = vsel %vm91, %v121, 0
  %v129 = vsel %vm91, %v122, 0
  %131 = vmatpush.msra.mxu0 0.0
  %132 = vmatpush.msra.mxu0 0.0
  %133 = vmatpush.msra.mxu0 0.0
  %134 = vmatpush.msra.mxu0 0.0
  %135 = vmatpush.msra.mxu0 0.0
  %136 = vmatpush.msra.mxu0 0.0
  %137 = vmatpush.msra.mxu0 0.0
  %138 = vmatpush.msra.mxu0 0.0
  %139 = vmatpush.msra.mxu0 0.0
  %140 = vmatpush.msra.mxu0 0.0
  %141 = vmatpush.msra.mxu0 0.0
  %142 = vmatpush.msra.mxu0 0.0
  %143 = vmatpush.msra.mxu0 0.0
  %144 = vmatpush.msra.mxu0 0.0
  %145 = vmatpush.msra.mxu0 %v124
  %146 = vmatpush.msra.mxu0 %v123
  %147 = vmatmul.f32.gmra.mxu0 %v126
  %v148 = vpop.f32.mrf.mxu0
  %v149 = vadd.f32 0.0, %v148
  %150 = vmatmul.f32.gmra.mxu0 %v129
  %v151 = vpop.f32.mrf.mxu0
  %v152 = vadd.f32 0.0, %v151
  %153 = vdwg.mxu0
  %v154 = vld [vmem:[%s6] sm:$0x1]
  %v156 = vperm.slane %v154, 0
  %158 = vmatpush.msra.mxu0 0.0
  %159 = vmatpush.msra.mxu0 0.0
  %160 = vmatpush.msra.mxu0 0.0
  %161 = vmatpush.msra.mxu0 0.0
  %162 = vmatpush.msra.mxu0 0.0
  %163 = vmatpush.msra.mxu0 0.0
  %164 = vmatpush.msra.mxu0 0.0
  %165 = vmatpush.msra.mxu0 0.0
  %166 = vmatpush.msra.mxu0 0.0
  %167 = vmatpush.msra.mxu0 0.0
  %168 = vmatpush.msra.mxu0 0.0
  %169 = vmatpush.msra.mxu0 0.0
  %170 = vmatpush.msra.mxu0 0.0
  %171 = vmatpush.msra.mxu0 0.0
  %172 = vmatpush.msra.mxu0 %v152
  %173 = vmatpush.msra.mxu0 %v149
  %174 = vmatmul.f32.gmra.mxu0 %v93
  %v175 = vpop.f32.mrf.mxu0
  %v176 = vadd.f32 %v156, %v175
  %177 = vmatmul.f32.gmra.mxu0 %v96
  %v178 = vpop.f32.mrf.mxu0
  %v179 = vadd.f32 %v156, %v178
  %180 = vdwg.mxu0
  %v181 = vmax.f32 %v176, 0.0
  %v182 = vmax.f32 %v179, 0.0
  %v183 = vsel %vm57, %v45, 0.0
  %v184 = vsel %vm57, %v46, 0.0
  %v185 = vadd.f32 %v183, %v184
  %v186 = vrot.slane %v185, 4
  %v187 = vadd.f32 %v185, %v186
  %v188 = vrot.slane %v187, 2
  %v189 = vadd.f32 %v187, %v188
  %v190 = vrot.slane %v189, 1
  %v191 = vadd.f32 %v189, %v190
  %v192 = vrcp.pop 16.0
  %v193 = vmul.f32 16.0, %v192
  %v194 = vsub.f32 1.0, %v193
  %v195 = vmul.f32 %v192, %v194
  %v196 = vadd.f32 %v192, %v195
  %vm197 = vweird.f32 %v192
  %v198 = vsel %vm197, %v192, %v196
  %v199 = vmul.f32 %v191, %v198
  %v200 = vld [vmem:[%s7] sm:$0xff]
  %v201 = vld [vmem:[%s7 + $0x8] sm:$0xff]
  %v202 = vld [vmem:[%s7 + $0x10] sm:$0xff]
  %v203 = vld [vmem:[%s7 + $0x18] sm:$0xff]
  %v204 = vld [vmem:[%s7 + $0x20] sm:$0xff]
  %v205 = vld [vmem:[%s7 + $0x28] sm:$0xff]
  %v206 = vld [vmem:[%s7 + $0x30] sm:$0xff]
  %v207 = vld [vmem:[%s7 + $0x38] sm:$0xff]
  %v208 = vld [vmem:[%s8] sm:$0x1]
  %v210 = vsel %vm57, %v199, 0
  %212 = vmatpush.msra.mxu0 0.0
  %213 = vmatpush.msra.mxu0 0.0
  %214 = vmatpush.msra.mxu0 0.0
  %215 = vmatpush.msra.mxu0 0.0
  %216 = vmatpush.msra.mxu0 0.0
  %217 = vmatpush.msra.mxu0 0.0
  %218 = vmatpush.msra.mxu0 0.0
  %219 = vmatpush.msra.mxu0 0.0
  %220 = vmatpush.msra.mxu0 %v207
  %221 = vmatpush.msra.mxu0 %v206
  %222 = vmatpush.msra.mxu0 %v205
  %223 = vmatpush.msra.mxu0 %v204
  %224 = vmatpush.msra.mxu0 %v203
  %225 = vmatpush.msra.mxu0 %v202
  %226 = vmatpush.msra.mxu0 %v201
  %227 = vmatpush.msra.mxu0 %v200
  %228 = vmatmul.f32.gmra.mxu0 %v210
  %v229 = vpop.f32.mrf.mxu0
  %v230 = vadd.f32 %v208, %v229
  %231 = vdwg.mxu0
  %v232 = vmax.f32 %v230, 0.0
  %v233 = vld [vmem:[%s9] sm:$0xff]
  %v234 = vld [vmem:[%s9 + $0x8] sm:$0xff]
  %v235 = vld [vmem:[%s9 + $0x10] sm:$0xff]
  %v236 = vld [vmem:[%s9 + $0x18] sm:$0xff]
  %v237 = vld [vmem:[%s9 + $0x20] sm:$0xff]
  %v238 = vld [vmem:[%s9 + $0x28] sm:$0xff]
  %v239 = vld [vmem:[%s9 + $0x30] sm:$0xff]
  %v240 = vld [vmem:[%s9 + $0x38] sm:$0xff]
  %v241 = vld [vmem:[%s9 + $0x40] sm:$0xff]
  %v242 = vld [vmem:[%s9 + $0x48] sm:$0xff]
  %v243 = vld [vmem:[%s9 + $0x50] sm:$0xff]
  %v244 = vld [vmem:[%s9 + $0x58] sm:$0xff]
  %v245 = vld [vmem:[%s9 + $0x60] sm:$0xff]
  %v246 = vld [vmem:[%s9 + $0x68] sm:$0xff]
  %v247 = vld [vmem:[%s9 + $0x70] sm:$0xff]
  %v248 = vld [vmem:[%s9 + $0x78] sm:$0xff]
  %v249 = vld [vmem:[%s10] sm:$0x1]
  %250 = vmatpush.msra.mxu0 %v248
  %251 = vmatpush.msra.mxu0 %v247
  %252 = vmatpush.msra.mxu0 %v246
  %253 = vmatpush.msra.mxu0 %v245
  %254 = vmatpush.msra.mxu0 %v244
  %255 = vmatpush.msra.mxu0 %v243
  %256 = vmatpush.msra.mxu0 %v242
  %257 = vmatpush.msra.mxu0 %v241
  %258 = vmatpush.msra.mxu0 %v240
  %259 = vmatpush.msra.mxu0 %v239
  %260 = vmatpush.msra.mxu0 %v238
  %261 = vmatpush.msra.mxu0 %v237
  %262 = vmatpush.msra.mxu0 %v236
  %263 = vmatpush.msra.mxu0 %v235
  %264 = vmatpush.msra.mxu0 %v234
  %265 = vmatpush.msra.mxu0 %v233
  %266 = vmatmul.f32.gmra.mxu0 %v232
  %v267 = vpop.f32.mrf.mxu0
  %v268 = vadd.f32 %v249, %v267
  %269 = vdwg.mxu0
  %s270 = sld [smem:[#allocation2]]
  %v271 = vstv %s270
  %v272 = vmul.f32 %v271, %v181
  %v273 = vmul.f32 %v271, %v182
  %v274 = vperm.slane %v268, 0
  %v275 = vadd.f32 %v272, %v274
  %v276 = vadd.f32 %v273, %v274
  %v277 = vmax.f32 %v275, 0.0
  %v278 = vmax.f32 %v276, 0.0
  %281 = vrot.lane.b32.xlu0 %v277, 96
  %v282 = vpop.permute.xlu0 %281
  %283 = vrot.lane.b32.xlu0 %v278, 96
  %v284 = vpop.permute.xlu0 %283
  %v287 = vmax.f32 %v277, %v282
  %v288 = vmax.f32 %v278, %v284
  %291 = vrot.lane.b32.xlu0 %v287, 112
  %v292 = vpop.permute.xlu0 %291
  %293 = vrot.lane.b32.xlu0 %v288, 112
  %v294 = vpop.permute.xlu0 %293
  %v297 = vmax.f32 %v287, %v292
  %v298 = vmax.f32 %v288, %v294
  %301 = vrot.lane.b32.xlu0 %v297, 120
  %v302 = vpop.permute.xlu0 %301
  %303 = vrot.lane.b32.xlu0 %v298, 120
  %v304 = vpop.permute.xlu0 %303
  %v307 = vmax.f32 %v297, %v302
  %v308 = vmax.f32 %v298, %v304
  %v309 = vld [vmem:[%s12] sm:$0xff]
  %vm310 = vcmask 64512
  %v312 = vsel %vm310, %v307, 0
  %v315 = vsel %vm310, %v308, 0
  %317 = vmatpush.msra.mxu0 0.0
  %318 = vmatpush.msra.mxu0 0.0
  %319 = vmatpush.msra.mxu0 0.0
  %320 = vmatpush.msra.mxu0 0.0
  %321 = vmatpush.msra.mxu0 0.0
  %322 = vmatpush.msra.mxu0 0.0
  %323 = vmatpush.msra.mxu0 0.0
  %324 = vmatpush.msra.mxu0 0.0
  %325 = vmatpush.msra.mxu0 0.0
  %326 = vmatpush.msra.mxu0 0.0
  %327 = vmatpush.msra.mxu0 0.0
  %328 = vmatpush.msra.mxu0 0.0
  %329 = vmatpush.msra.mxu0 0.0
  %330 = vmatpush.msra.mxu0 0.0
  %331 = vmatpush.msra.mxu0 0.0
  %332 = vmatpush.msra.mxu0 %v309
  %333 = vmatmul.f32.gmra.mxu0 %v312
  %v334 = vpop.f32.mrf.mxu0
  %v335 = vadd.f32 0.0, %v334
  %336 = vmatmul.f32.gmra.mxu0 %v315
  %v337 = vpop.f32.mrf.mxu0
  %v338 = vadd.f32 0.0, %v337
  %339 = vdwg.mxu0
  %v340 = vsub.f32 %v277, %v335
  %v341 = vsub.f32 %v278, %v338
  %v342 = vmul.f32 %v340, 1.442695
  %v343 = vpow.pop %v342
  %v344 = vmul.f32 %v341, 1.442695
  %v345 = vpow.pop %v344
  %v346 = vld [vmem:[%s11] sm:$0xff]
  %v347 = vld [vmem:[%s11 + $0x8] sm:$0xff]
  %v348 = vld [vmem:[%s11 + $0x10] sm:$0xff]
  %v349 = vld [vmem:[%s11 + $0x18] sm:$0xff]
  %v350 = vld [vmem:[%s11 + $0x20] sm:$0xff]
  %v351 = vld [vmem:[%s11 + $0x28] sm:$0xff]
  %v352 = vld [vmem:[%s11 + $0x30] sm:$0xff]
  %v353 = vld [vmem:[%s11 + $0x38] sm:$0xff]
  %v355 = vsel %vm57, %v343, 0
  %v358 = vsel %vm57, %v345, 0
  %360 = vmatpush.msra.mxu0 0.0
  %361 = vmatpush.msra.mxu0 0.0
  %362 = vmatpush.msra.mxu0 0.0
  %363 = vmatpush.msra.mxu0 0.0
  %364 = vmatpush.msra.mxu0 0.0
  %365 = vmatpush.msra.mxu0 0.0
  %366 = vmatpush.msra.mxu0 0.0
  %367 = vmatpush.msra.mxu0 0.0
  %368 = vmatpush.msra.mxu0 %v353
  %369 = vmatpush.msra.mxu0 %v352
  %370 = vmatpush.msra.mxu0 %v351
  %371 = vmatpush.msra.mxu0 %v350
  %372 = vmatpush.msra.mxu0 %v349
  %373 = vmatpush.msra.mxu0 %v348
  %374 = vmatpush.msra.mxu0 %v347
  %375 = vmatpush.msra.mxu0 %v346
  %376 = vmatmul.f32.gmra.mxu0 %v355
  %v377 = vpop.f32.mrf.mxu0
  %v378 = vadd.f32 0.0, %v377
  %379 = vmatmul.f32.gmra.mxu0 %v358
  %v380 = vpop.f32.mrf.mxu0
  %v381 = vadd.f32 0.0, %v380
  %382 = vdwg.mxu0
  %v383 = vmul.f32 %v45, %v343
  %v384 = vmul.f32 %v46, %v345
  %v386 = vsel %vm57, %v383, 0
  %v389 = vsel %vm57, %v384, 0
  %391 = vmatpush.msra.mxu0 0.0
  %392 = vmatpush.msra.mxu0 0.0
  %393 = vmatpush.msra.mxu0 0.0
  %394 = vmatpush.msra.mxu0 0.0
  %395 = vmatpush.msra.mxu0 0.0
  %396 = vmatpush.msra.mxu0 0.0
  %397 = vmatpush.msra.mxu0 0.0
  %398 = vmatpush.msra.mxu0 0.0
  %399 = vmatpush.msra.mxu0 %v353
  %400 = vmatpush.msra.mxu0 %v352
  %401 = vmatpush.msra.mxu0 %v351
  %402 = vmatpush.msra.mxu0 %v350
  %403 = vmatpush.msra.mxu0 %v349
  %404 = vmatpush.msra.mxu0 %v348
  %405 = vmatpush.msra.mxu0 %v347
  %406 = vmatpush.msra.mxu0 %v346
  %407 = vmatmul.f32.gmra.mxu0 %v386
  %v408 = vpop.f32.mrf.mxu0
  %v409 = vadd.f32 0.0, %v408
  %410 = vmatmul.f32.gmra.mxu0 %v389
  %v411 = vpop.f32.mrf.mxu0
  %v412 = vadd.f32 0.0, %v411
  %413 = vdwg.mxu0
  %v414 = vrcp.pop %v378
  %v415 = vrcp.pop %v381
  %v416 = vmul.f32 %v409, %v414
  %v417 = vmul.f32 %v412, %v415
  %418 = vst.msk [vmem:[%s13] sm:$0xff] %vm310, %v416
  %419 = vst.msk [vmem:[%s13 + $0x8] sm:$0xff] %vm310, %v417
  // Predicated region
  $region54: #{tpu_custom_call.1} parent=0 // pred_check
    _
  $region55: #{tpu_custom_call.1} parent=0 // pred_check_branch
    %421 = sbr.rel (0) target = $region57
  $region56: #{tpu_custom_call.1} parent=0 // pred_region
    _
  $region57: #{tpu_custom_call.1} parent=0 // pred_fallthru
    _
  // Predicated region
  $region58: #{tpu_custom_call.1} parent=0 // pred_check
    _
  $region59: #{tpu_custom_call.1} parent=0 // pred_check_branch
    %423 = sbr.rel (0) target = $region61
  $region60: #{tpu_custom_call.1} parent=0 // pred_region
    _
  $region61: #{tpu_custom_call.1} parent=0 // pred_fallthru
    _

</llo_original>
